<compile_context>
chip_gen: v5e
topology: v5e:2x2
jax: 0.10.0
libtpu: 0.0.40
codegen_flags: <defaults>
</compile_context>

<pallas_src>
import functools

import jax
import jax.numpy as jnp
from jax.experimental import pallas as pl
from jax.experimental.pallas import tpu as pltpu

_LANE = 128


def _cae_kernel(x_ref, w1t_ref, w2t_ref, o_ref, sum_acc, max_acc, *,
                hw, block_hw, block_n, num_hw_chunks):
    """One grid step: accumulate sum/max over an HW chunk; finalize on last.

    x_ref:   (BN, C, THW)   input chunk (native dtype)
    w1t_ref: (C, Chid)      fc[0].weight^T (1x1 conv weight, squeezed)
    w2t_ref: (Chid, C)      fc[2].weight^T
    o_ref:   (BN, 1, C)     sigmoid(fc(avg) + fc(max)), lane-dense C
    sum_acc / max_acc: (BN, C, 128) f32 lane-partial reductions (VMEM scratch)
    """
    k = pl.program_id(1)
    last = num_hw_chunks - 1

    # ---- init accumulators on the first HW chunk of this batch block ----
    @pl.when(k == 0)
    def _init():
        sum_acc[...] = jnp.zeros_like(sum_acc)
        max_acc[...] = jnp.full_like(max_acc, -jnp.inf)   # NOT 0: all-neg inputs

    # ---- lane-partial accumulation: one 128-lane group at a time (VPU) ----
    def accum_groups(masked):
        n_groups = block_hw // _LANE
        valid = (hw - last * block_hw) if masked else block_hw   # static
        ps = pm = None
        for g in range(n_groups):
            lo = g * _LANE
            if masked and lo >= valid:
                break                                     # group entirely padding
            xg = x_ref[:, :, lo:lo + _LANE].astype(jnp.float32)  # (BN, C, 128)
            if masked and lo + _LANE > valid:
                lane = jax.lax.broadcasted_iota(jnp.int32, (1, 1, _LANE), 2)
                ok = lane < (valid - lo)
                xg_s = jnp.where(ok, xg, 0.0)
                xg_m = jnp.where(ok, xg, -jnp.inf)
            else:
                xg_s = xg_m = xg
            ps = xg_s if ps is None else ps + xg_s
            pm = xg_m if pm is None else jnp.maximum(pm, xg_m)
        sum_acc[...] += ps
        max_acc[...] = jnp.maximum(max_acc[...], pm)

    if block_hw % _LANE == 0:
        if hw % block_hw != 0:
            # Ragged tail: only the last chunk pays the mask cost.
            @pl.when(k < last)
            def _full_chunk():
                accum_groups(masked=False)

            @pl.when(k == last)
            def _tail_chunk():
                accum_groups(masked=True)
        else:
            accum_groups(masked=False)
    else:
        # block_hw == hw (single exact chunk): direct cross-lane reduce, lane 0.
        xs = x_ref[...]
        sum_acc[:, :, 0:1] += jnp.sum(xs, axis=-1, keepdims=True,
                                      dtype=jnp.float32)
        max_acc[:, :, 0:1] = jnp.maximum(
            max_acc[:, :, 0:1],
            jnp.max(xs, axis=-1, keepdims=True).astype(jnp.float32))

    # ---- finalize once per batch block: fused fc(avg)+fc(max) -> sigmoid ----
    @pl.when(k == last)
    def _finalize():
        avg = jnp.sum(sum_acc[...], axis=-1) * (1.0 / hw)   # (BN, C), single XLU reduce
        mx = jnp.max(max_acc[...], axis=-1)                 # (BN, C)
        stacked = jnp.concatenate([avg, mx], axis=0)        # (2*BN, C): one matmul/layer
        h = jnp.maximum(
            jnp.dot(stacked, w1t_ref[...], preferred_element_type=jnp.float32),
            0.0)                                            # (2*BN, Chid)
        y = jnp.dot(h, w2t_ref[...], preferred_element_type=jnp.float32)
        out = jax.nn.sigmoid(y[:block_n] + y[block_n:])     # (BN, C)
        o_ref[...] = out[:, None, :].astype(o_ref.dtype)    # lane-dense store


def _pick_blocks(n, c, hw, itemsize):
    """Choose (block_n, block_hw) for the x BlockSpec.

    Targets ~8 MiB per x block (amortizes ~0.35 us per-grid-step overhead);
    double-buffered x + tiny weights + lane-padded f32 scratch stay well under
    the explicit 48 MiB VMEM limit, which is safe even on v7x (64 MiB / TC).
    """
    X_TARGET = 8 * 1024 * 1024        # bytes of x per block
    ROW_BUDGET = 16 * 1024 * 1024     # budget for the N-batched path
    row_bytes = c * hw * itemsize     # one batch element of x
    if row_bytes > X_TARGET:
        # Split HW into lane-aligned chunks; one batch row per grid step.
        block_n = 1
        block_hw = (X_TARGET // (c * itemsize)) // _LANE * _LANE
        block_hw = min(max(block_hw, _LANE), hw)
    else:
        # Whole spatial extent per step; batch several N toward the budget.
        block_hw = hw
        per_row = 2 * row_bytes + 2 * c * _LANE * 4   # 2x-buffered x + f32 sum/max scratch
        want = max(1, ROW_BUDGET // max(per_row, 1))
        block_n = max(d for d in range(1, n + 1) if n % d == 0 and d <= want)
        # NOTE: on a 2-TensorCore part (v7x) consider capping block_n at n//2 so
        # the "parallel" N axis has >=2 steps; on single-TC v5e/v6e bigger wins.
    return block_n, block_hw


def channel_attention_enhancement(x, w1, w2, *, block_n=None, block_hw=None):
    """CBAM channel attention.

    x:  (N, C, H, W)
    w1: (C//ratio, C)  -- fc[0].weight[:, :, 0, 0]
    w2: (C, C//ratio)  -- fc[2].weight[:, :, 0, 0]
    returns (N, C, 1, 1) = sigmoid(fc(avg_pool(x)) + fc(max_pool(x)))
    """
    n, c, h, w = x.shape
    chid = w1.shape[0]
    hw = h * w
    assert jnp.issubdtype(x.dtype, jnp.floating), \
        "kernel assumes floating x (-inf max init / mask fill)"
    x_flat = x.reshape(n, c, hw)

    auto_bn, auto_bhw = _pick_blocks(n, c, hw, x.dtype.itemsize)
    block_n = auto_bn if block_n is None else block_n
    block_hw = auto_bhw if block_hw is None else block_hw
    assert n % block_n == 0, "block_n must divide N"
    assert block_hw == hw or block_hw % _LANE == 0, \
        "block_hw must be lane-aligned or equal HW"

    num_hw_chunks = pl.cdiv(hw, block_hw)
    grid = (n // block_n, num_hw_chunks)

    # Pre-transpose the 1x1-conv weights once (tiny); keep native dtype so no
    # f32 weight copies are materialized in-kernel.
    w1t = w1.T                                            # (C, Chid)
    w2t = w2.T                                            # (Chid, C)

    kernel = functools.partial(_cae_kernel, hw=hw, block_hw=block_hw,
                               block_n=block_n, num_hw_chunks=num_hw_chunks)

    cost = pl.CostEstimate(
        flops=int(2 * n * c * hw + 8 * n * c * chid),
        transcendentals=int(n * c),
        bytes_accessed=int(n * c * hw * x.dtype.itemsize
                           + 2 * c * chid * w1.dtype.itemsize
                           + n * c * x.dtype.itemsize),
    )

    out = pl.pallas_call(
        kernel,
        out_shape=jax.ShapeDtypeStruct((n, 1, c), x.dtype),
        grid_spec=pltpu.PrefetchScalarGridSpec(
            num_scalar_prefetch=0,
            grid=grid,
            in_specs=[
                pl.BlockSpec((block_n, c, block_hw), lambda i, k: (i, 0, k)),
                pl.BlockSpec((c, chid), lambda i, k: (0, 0)),   # resident weights
                pl.BlockSpec((chid, c), lambda i, k: (0, 0)),
            ],
            out_specs=pl.BlockSpec((block_n, 1, c), lambda i, k: (i, 0, 0)),
            scratch_shapes=[
                pltpu.VMEM((block_n, c, _LANE), jnp.float32),   # lane-partial sum
                pltpu.VMEM((block_n, c, _LANE), jnp.float32),   # lane-partial max
            ],
        ),
        compiler_params=pltpu.CompilerParams(
            dimension_semantics=("parallel", "arbitrary"),
            vmem_limit_bytes=48 * 1024 * 1024),
        cost_estimate=cost,
    )(x_flat, w1t, w2t)
    return out.reshape(n, c, 1, 1)


def _reference(x, w1, w2):
    # Pure-JAX reference matching the PyTorch module semantics.
    avg = jnp.mean(x, axis=(2, 3))                        # (N, C)
    mx = jnp.max(x, axis=(2, 3))                          # (N, C)

    def fc(v):                                            # v: (N, C)
        h = jnp.maximum(v @ w1.T, 0.0)                    # (N, Chid)
        return h @ w2.T                                   # (N, C)

    out = jax.nn.sigmoid(fc(avg) + fc(mx))
    return out[:, :, None, None]


if __name__ == "__main__":
    key = jax.random.PRNGKey(0)
    kx, k1, k2, kx2 = jax.random.split(key, 4)

    N, C, H, W = 2, 32, 16, 16            # in_planes=32 -> hidden = 32 // 16 = 2
    Chid = C // 16

    x = jax.random.normal(kx, (N, C, H, W), dtype=jnp.float32)
    w1 = jax.random.normal(k1, (Chid, C), dtype=jnp.float32) * 0.1
    w2 = jax.random.normal(k2, (C, Chid), dtype=jnp.float32) * 0.1
    ref = _reference(x, w1, w2)

    # 1) Default blocks: whole spatial extent per step, lane-partial path.
    out = jax.block_until_ready(channel_attention_enhancement(x, w1, w2))
    assert out.shape == (N, C, 1, 1)
    assert jnp.allclose(out, ref, atol=1e-5, rtol=1e-5)

    # 2) Forced HW-split reduction (2 exact chunks), N batched per step.
    out2 = jax.block_until_ready(
        channel_attention_enhancement(x, w1, w2, block_n=2, block_hw=128))
    assert jnp.allclose(out2, ref, atol=1e-5, rtol=1e-5)

    # 3) HW=288 (not a multiple of 128), default blocks -> single exact chunk
    #    exercising the direct cross-lane fallback path.
    x2 = jax.random.normal(kx2, (N, C, 16, 18), dtype=jnp.float32)
    ref3 = _reference(x2, w1, w2)
    out3 = jax.block_until_ready(channel_attention_enhancement(x2, w1, w2))
    assert jnp.allclose(out3, ref3, atol=1e-5, rtol=1e-5)

    # 4) HW=288 split into 128-wide chunks -> masked (gated) final chunk and
    #    true-HW average.
    out4 = jax.block_until_ready(
        channel_attention_enhancement(x2, w1, w2, block_n=1, block_hw=128))
    assert jnp.allclose(out4, ref3, atol=1e-5, rtol=1e-5)

    print("KERNEL_OK")
</pallas_src>

<mosaic_0001>
module attributes {stable_mosaic.version = 11 : i64} {
  func.func @_cae_kernel(%arg0: i32, %arg1: i32, %arg2: memref<2x32x256xf32, #tpu.memory_space<vmem>>, %arg3: memref<32x2xf32, #tpu.memory_space<vmem>>, %arg4: memref<2x32xf32, #tpu.memory_space<vmem>>, %arg5: memref<2x1x32xf32, #tpu.memory_space<vmem>>, %arg6: memref<2x32x128xf32, #tpu.memory_space<vmem>>, %arg7: memref<2x32x128xf32, #tpu.memory_space<vmem>>) attributes {dimension_semantics = [#tpu.dimension_semantics<parallel>, #tpu.dimension_semantics<arbitrary>], iteration_bounds = array<i64: 1, 1>, scalar_prefetch = 0 : i64, scratch_operands = 2 : i64, tpu.core_type = #tpu.core_type<tc>, window_params = [{transform_indices = @transform_0, window_bounds = array<i64: 2, 32, 256>}, {pipeline_mode = #tpu.pipeline_mode<synchronous>, transform_indices = @transform_1, window_bounds = array<i64: 32, 2>}, {pipeline_mode = #tpu.pipeline_mode<synchronous>, transform_indices = @transform_2, window_bounds = array<i64: 2, 32>}, {transform_indices = @transform_3, window_bounds = array<i64: 2, 1, 32>}]} {
    %c0_i32 = arith.constant 0 : i32
    %0 = arith.cmpi eq, %arg1, %c0_i32 : i32
    %1 = arith.extui %0 : i1 to i32
    %c0_i32_0 = arith.constant 0 : i32
    %2 = arith.cmpi ne, %1, %c0_i32_0 : i32
    scf.if %2 {
      %cst = arith.constant 0.000000e+00 : f32
      %16 = vector.broadcast %cst : f32 to vector<2x32x128xf32>
      %c0_19 = arith.constant 0 : index
      %c0_20 = arith.constant 0 : index
      %c0_21 = arith.constant 0 : index
      %17 = vector.load %arg6[%c0_19, %c0_20, %c0_21] : memref<2x32x128xf32, #tpu.memory_space<vmem>>, vector<2x32x128xf32>
      tpu.vector_store %arg6[%c0_19, %c0_20, %c0_21], %16 {strides = array<i32>} : memref<2x32x128xf32, #tpu.memory_space<vmem>>, vector<2x32x128xf32>,
      %cst_22 = arith.constant 0xFF800000 : f32
      %18 = vector.broadcast %cst_22 : f32 to vector<2x32x128xf32>
      %c0_23 = arith.constant 0 : index
      %c0_24 = arith.constant 0 : index
      %c0_25 = arith.constant 0 : index
      %19 = vector.load %arg7[%c0_23, %c0_24, %c0_25] : memref<2x32x128xf32, #tpu.memory_space<vmem>>, vector<2x32x128xf32>
      tpu.vector_store %arg7[%c0_23, %c0_24, %c0_25], %18 {strides = array<i32>} : memref<2x32x128xf32, #tpu.memory_space<vmem>>, vector<2x32x128xf32>,
    } else {
    }
    %c0 = arith.constant 0 : index
    %c0_1 = arith.constant 0 : index
    %c0_2 = arith.constant 0 : index
    %3 = vector.load %arg2[%c0, %c0_1, %c0_2] : memref<2x32x256xf32, #tpu.memory_space<vmem>>, vector<2x32x128xf32>
    %c0_3 = arith.constant 0 : index
    %c0_4 = arith.constant 0 : index
    %c128 = arith.constant 128 : index
    %4 = vector.load %arg2[%c0_3, %c0_4, %c128] : memref<2x32x256xf32, #tpu.memory_space<vmem>>, vector<2x32x128xf32>
    %5 = arith.addf %3, %4 : vector<2x32x128xf32>
    %6 = arith.maximumf %3, %4 : vector<2x32x128xf32>
    %c0_5 = arith.constant 0 : index
    %c0_6 = arith.constant 0 : index
    %c0_7 = arith.constant 0 : index
    %7 = vector.load %arg6[%c0_5, %c0_6, %c0_7] : memref<2x32x128xf32, #tpu.memory_space<vmem>>, vector<2x32x128xf32>
    %8 = arith.addf %7, %5 : vector<2x32x128xf32>
    %c0_8 = arith.constant 0 : index
    %c0_9 = arith.constant 0 : index
    %c0_10 = arith.constant 0 : index
    %9 = vector.load %arg6[%c0_8, %c0_9, %c0_10] : memref<2x32x128xf32, #tpu.memory_space<vmem>>, vector<2x32x128xf32>
    tpu.vector_store %arg6[%c0_8, %c0_9, %c0_10], %8 {strides = array<i32>} : memref<2x32x128xf32, #tpu.memory_space<vmem>>, vector<2x32x128xf32>,
    %c0_11 = arith.constant 0 : index
    %c0_12 = arith.constant 0 : index
    %c0_13 = arith.constant 0 : index
    %10 = vector.load %arg7[%c0_11, %c0_12, %c0_13] : memref<2x32x128xf32, #tpu.memory_space<vmem>>, vector<2x32x128xf32>
    %11 = arith.maximumf %10, %6 : vector<2x32x128xf32>
    %c0_14 = arith.constant 0 : index
    %c0_15 = arith.constant 0 : index
    %c0_16 = arith.constant 0 : index
    %12 = vector.load %arg7[%c0_14, %c0_15, %c0_16] : memref<2x32x128xf32, #tpu.memory_space<vmem>>, vector<2x32x128xf32>
    tpu.vector_store %arg7[%c0_14, %c0_15, %c0_16], %11 {strides = array<i32>} : memref<2x32x128xf32, #tpu.memory_space<vmem>>, vector<2x32x128xf32>,
    %c0_i32_17 = arith.constant 0 : i32
    %13 = arith.cmpi eq, %arg1, %c0_i32_17 : i32
    %14 = arith.extui %13 : i1 to i32
    %c0_i32_18 = arith.constant 0 : i32
    %15 = arith.cmpi ne, %14, %c0_i32_18 : i32
    scf.if %15 {
      %c0_19 = arith.constant 0 : index
      %c0_20 = arith.constant 0 : index
      %c0_21 = arith.constant 0 : index
      %16 = vector.load %arg6[%c0_19, %c0_20, %c0_21] : memref<2x32x128xf32, #tpu.memory_space<vmem>>, vector<2x32x128xf32>
      %cst = arith.constant dense<0.000000e+00> : vector<2x32xf32>
      %17 = vector.multi_reduction <add>, %16, %cst [2] : vector<2x32x128xf32> to vector<2x32xf32>
      %cst_22 = arith.constant 3.906250e-03 : f32
      %18 = vector.broadcast %cst_22 : f32 to vector<2x32xf32>
      %19 = arith.mulf %17, %18 : vector<2x32xf32>
      %c0_23 = arith.constant 0 : index
      %c0_24 = arith.constant 0 : index
      %c0_25 = arith.constant 0 : index
      %20 = vector.load %arg7[%c0_23, %c0_24, %c0_25] : memref<2x32x128xf32, #tpu.memory_space<vmem>>, vector<2x32x128xf32>
      %cst_26 = arith.constant dense<0xFF800000> : vector<2x32xf32>
      %21 = vector.multi_reduction <maximumf>, %20, %cst_26 [2] : vector<2x32x128xf32> to vector<2x32xf32>
      %22 = tpu.concatenate %19, %21 in 0 : vector<2x32xf32>, vector<2x32xf32> -> vector<4x32xf32>
      %c0_27 = arith.constant 0 : index
      %c0_28 = arith.constant 0 : index
      %23 = vector.load %arg3[%c0_27, %c0_28] : memref<32x2xf32, #tpu.memory_space<vmem>>, vector<32x2xf32>
      %cst_29 = arith.constant dense<0.000000e+00> : vector<4x2xf32>
      %24 = tpu.matmul %22, %23, %cst_29 {dimension_numbers = #tpu.dot_dimension_numbers<[1], [0], [0], [1], [0, 0, 1, 1], [], []>} : vector<4x32xf32>, vector<32x2xf32>, vector<4x2xf32> -> vector<4x2xf32>
      %cst_30 = arith.constant 0.000000e+00 : f32
      %25 = vector.broadcast %cst_30 : f32 to vector<4x2xf32>
      %26 = arith.maximumf %24, %25 : vector<4x2xf32>
      %c0_31 = arith.constant 0 : index
      %c0_32 = arith.constant 0 : index
      %27 = vector.load %arg4[%c0_31, %c0_32] : memref<2x32xf32, #tpu.memory_space<vmem>>, vector<2x32xf32>
      %cst_33 = arith.constant dense<0.000000e+00> : vector<4x32xf32>
      %28 = tpu.matmul %26, %27, %cst_33 {dimension_numbers = #tpu.dot_dimension_numbers<[1], [0], [0], [1], [0, 0, 1, 1], [], []>} : vector<4x2xf32>, vector<2x32xf32>, vector<4x32xf32> -> vector<4x32xf32>
      %29 = vector.extract_strided_slice %28 {offsets = [0, 0], sizes = [2, 32], strides = [1, 1]} : vector<4x32xf32> to vector<2x32xf32>
      %30 = vector.extract_strided_slice %28 {offsets = [2, 0], sizes = [2, 32], strides = [1, 1]} : vector<4x32xf32> to vector<2x32xf32>
      %31 = arith.addf %29, %30 : vector<2x32xf32>
      %32 = arith.negf %31 : vector<2x32xf32>
      %33 = math.exp %32 : vector<2x32xf32>
      %cst_34 = arith.constant 1.000000e+00 : f32
      %34 = vector.broadcast %cst_34 : f32 to vector<2x32xf32>
      %35 = arith.addf %34, %33 : vector<2x32xf32>
      %36 = arith.divf %34, %35 : vector<2x32xf32>
      %37 = vector.shape_cast %36 : vector<2x32xf32> to vector<2x1x32xf32>
      %c0_35 = arith.constant 0 : index
      %c0_36 = arith.constant 0 : index
      %c0_37 = arith.constant 0 : index
      %38 = vector.load %arg5[%c0_35, %c0_36, %c0_37] : memref<2x1x32xf32, #tpu.memory_space<vmem>>, vector<2x1x32xf32>
      tpu.vector_store %arg5[%c0_35, %c0_36, %c0_37], %37 {strides = array<i32>} : memref<2x1x32xf32, #tpu.memory_space<vmem>>, vector<2x1x32xf32>,
    } else {
    }
    return
  }
  func.func @transform_0(%arg0: i32, %arg1: i32) -> (i32, i32, i32) {
    %c0_i32 = arith.constant 0 : i32
    %c0_i32_0 = arith.constant 0 : i32
    return %arg0, %c0_i32, %arg1 : i32, i32, i32
  }
  func.func @transform_1(%arg0: i32, %arg1: i32) -> (i32, i32) {
    %c0_i32 = arith.constant 0 : i32
    %c0_i32_0 = arith.constant 0 : i32
    %c0_i32_1 = arith.constant 0 : i32
    return %c0_i32, %c0_i32_0 : i32, i32
  }
  func.func @transform_2(%arg0: i32, %arg1: i32) -> (i32, i32) {
    %c0_i32 = arith.constant 0 : i32
    %c0_i32_0 = arith.constant 0 : i32
    %c0_i32_1 = arith.constant 0 : i32
    return %c0_i32, %c0_i32_0 : i32, i32
  }
  func.func @transform_3(%arg0: i32, %arg1: i32) -> (i32, i32, i32) {
    %c0_i32 = arith.constant 0 : i32
    %c0_i32_0 = arith.constant 0 : i32
    %c0_i32_1 = arith.constant 0 : i32
    return %arg0, %c0_i32, %c0_i32_0 : i32, i32, i32
  }
}

</mosaic_0001>

<llo_original>
// kernel: tpu_custom_call.1
$region0: #{tpu_custom_call.1}
  #allocation0 [shape = 'u32[]', space=smem, size = 0x4, offset = 0x4, fixed_abs, tag = 'smem constant byte address 0x4 - core index']
  #allocation1 [shape = 'u32[72,128]{1,0:T(1,128)}', space=vmem, size = 0x9000, scoped, tag = 'internal scratch']
  #allocation2 [shape = 'f32[2,32,128]{2,1,0:T(8,128)}', space=vmem, size = 0x8000, scoped, tag = 'scratch operand']
  #allocation3 [shape = 'f32[2,32,128]{2,1,0:T(8,128)}', space=vmem, size = 0x8000, scoped, tag = 'scratch operand']
  %s0 = inlined_call_operand.hbm [shape: f32[2,32,256], index: 0, kind: input, shape index: {}]
  %s1 = inlined_call_operand.vmem [shape: f32[32,2], index: 1, kind: input, shape index: {}]
  %s2 = inlined_call_operand.vmem [shape: f32[2,32], index: 2, kind: input, shape index: {}]
  %s3 = inlined_call_operand.hbm [shape: f32[2,1,32], index: 3, kind: output, shape index: {}]
  %s4 = sld [smem:[#allocation0]]
  $region34: #{tpu_custom_call.1} parent=0
    _
  %s6 = ssub.s32 1, %s4
  %s7 = scalar_select 0, %s6, %s4
  $region1: #{tpu_custom_call.1} parent=0
    #allocation4 [shape = 'u8[65536]{0}', space=vmem, size = 0x10000, scoped, tag = 'input window, operand 0, single buffered']
    #allocation5 [shape = 's32[1]{0}', space=sflag, size = 0x4, scoped, tag = 'scoped memory for tpu_custom_call.1']
    #allocation6 [shape = 's32[1]{0}', space=sflag, size = 0x4, scoped, tag = 'scoped memory for tpu_custom_call.1']
    #allocation7 [shape = 'u8[1024]{0}', space=vmem, size = 0x400, scoped, tag = 'output window, operand 0, single buffered']
    %8 = vsyncpa [#allocation5], 0
    %9 = vsyncpa [#allocation6], 0
    // Predicated region
    $region2: #{tpu_custom_call.1} parent=1 // pred_check
      _
    $region3: #{tpu_custom_call.1} parent=1 // pred_check_branch
      %11 = sbr.rel (0) target = $region5
    $region4: #{tpu_custom_call.1} parent=1 // pred_region
      %13 = vsyncadd [#allocation5], 0
      %s14 = sshll.u32 %s0, 4
      %s15 = int_to_ptr.hbm [resolvable:$true] %s14
      %s16 = sshll.u32 [#allocation4], 4
      %s17 = int_to_ptr.vmem [resolvable:$true] %s16
      %22 = dma.hbm_to_vmem [thread:$0]  %s15, 2048, %s17, [#allocation5], 256, 256, 16
    $region5: #{tpu_custom_call.1} parent=1 // pred_fallthru
      _
    // Predicated region
    $region6: #{tpu_custom_call.1} parent=1 // pred_check
      _
    $region7: #{tpu_custom_call.1} parent=1 // pred_check_branch
      %24 = sbr.rel (0) target = $region9
    $region8: #{tpu_custom_call.1} parent=1 // pred_region
      _
    $region9: #{tpu_custom_call.1} parent=1 // pred_fallthru
      _
    // Predicated region
    $region10: #{tpu_custom_call.1} parent=1 // pred_check
      _
    $region11: #{tpu_custom_call.1} parent=1 // pred_check_branch
      %26 = sbr.rel (0) target = $region13
    $region12: #{tpu_custom_call.1} parent=1 // pred_region
      _
    $region13: #{tpu_custom_call.1} parent=1 // pred_fallthru
      _
    // Predicated region
    $region14: #{tpu_custom_call.1} parent=1 // pred_check
      _
    $region15: #{tpu_custom_call.1} parent=1 // pred_check_branch
      %28 = sbr.rel (0) target = $region17
    $region16: #{tpu_custom_call.1} parent=1 // pred_region
      %30 = dma.done [#allocation5], 2048
    $region17: #{tpu_custom_call.1} parent=1 // pred_fallthru
      _
    %p31 = scmp.eq.s32.totalorder 0, 0
    // Predicated region
    $region18: #{tpu_custom_call.1} parent=1 // pred_check
      %p32 = pneg %p31
    $region19: #{tpu_custom_call.1} parent=1 // pred_check_branch
      %34 = sbr.rel (%p32) target = $region21
    $region20: #{tpu_custom_call.1} parent=1 // pred_region
      %35 = vst [vmem:[#allocation2] sm:$0xff] 0.0
      %36 = vst [vmem:[#allocation2 + $0x8] sm:$0xff] 0.0
      %37 = vst [vmem:[#allocation2 + $0x10] sm:$0xff] 0.0
      %38 = vst [vmem:[#allocation2 + $0x18] sm:$0xff] 0.0
      %39 = vst [vmem:[#allocation2 + $0x20] sm:$0xff] 0.0
      %40 = vst [vmem:[#allocation2 + $0x28] sm:$0xff] 0.0
      %41 = vst [vmem:[#allocation2 + $0x30] sm:$0xff] 0.0
      %42 = vst [vmem:[#allocation2 + $0x38] sm:$0xff] 0.0
      %43 = vst [vmem:[#allocation3] sm:$0xff] -inf
      %44 = vst [vmem:[#allocation3 + $0x8] sm:$0xff] -inf
      %45 = vst [vmem:[#allocation3 + $0x10] sm:$0xff] -inf
      %46 = vst [vmem:[#allocation3 + $0x18] sm:$0xff] -inf
      %47 = vst [vmem:[#allocation3 + $0x20] sm:$0xff] -inf
      %48 = vst [vmem:[#allocation3 + $0x28] sm:$0xff] -inf
      %49 = vst [vmem:[#allocation3 + $0x30] sm:$0xff] -inf
      %50 = vst [vmem:[#allocation3 + $0x38] sm:$0xff] -inf
    $region21: #{tpu_custom_call.1} parent=1 // pred_fallthru
      _
    %v51 = vld [vmem:[#allocation4] sm:$0xff]
    %v52 = vld [vmem:[#allocation4 + $0x10] sm:$0xff]
    %v53 = vld [vmem:[#allocation4 + $0x20] sm:$0xff]
    %v54 = vld [vmem:[#allocation4 + $0x30] sm:$0xff]
    %v55 = vld [vmem:[#allocation4 + $0x40] sm:$0xff]
    %v56 = vld [vmem:[#allocation4 + $0x50] sm:$0xff]
    %v57 = vld [vmem:[#allocation4 + $0x60] sm:$0xff]
    %v58 = vld [vmem:[#allocation4 + $0x70] sm:$0xff]
    %v59 = vld [vmem:[#allocation4 + $0x8] sm:$0xff]
    %v60 = vld [vmem:[#allocation4 + $0x18] sm:$0xff]
    %v61 = vld [vmem:[#allocation4 + $0x28] sm:$0xff]
    %v62 = vld [vmem:[#allocation4 + $0x38] sm:$0xff]
    %v63 = vld [vmem:[#allocation4 + $0x48] sm:$0xff]
    %v64 = vld [vmem:[#allocation4 + $0x58] sm:$0xff]
    %v65 = vld [vmem:[#allocation4 + $0x68] sm:$0xff]
    %v66 = vld [vmem:[#allocation4 + $0x78] sm:$0xff]
    %v67 = vadd.f32 %v51, %v59
    %v68 = vadd.f32 %v52, %v60
    %v69 = vadd.f32 %v53, %v61
    %v70 = vadd.f32 %v54, %v62
    %v71 = vadd.f32 %v55, %v63
    %v72 = vadd.f32 %v56, %v64
    %v73 = vadd.f32 %v57, %v65
    %v74 = vadd.f32 %v58, %v66
    %v75 = vmax.f32 %v51, %v59
    %v76 = vmax.f32 %v52, %v60
    %v77 = vmax.f32 %v53, %v61
    %v78 = vmax.f32 %v54, %v62
    %v79 = vmax.f32 %v55, %v63
    %v80 = vmax.f32 %v56, %v64
    %v81 = vmax.f32 %v57, %v65
    %v82 = vmax.f32 %v58, %v66
    %v83 = vld [vmem:[#allocation2] sm:$0xff]
    %v84 = vld [vmem:[#allocation2 + $0x8] sm:$0xff]
    %v85 = vld [vmem:[#allocation2 + $0x10] sm:$0xff]
    %v86 = vld [vmem:[#allocation2 + $0x18] sm:$0xff]
    %v87 = vld [vmem:[#allocation2 + $0x20] sm:$0xff]
    %v88 = vld [vmem:[#allocation2 + $0x28] sm:$0xff]
    %v89 = vld [vmem:[#allocation2 + $0x30] sm:$0xff]
    %v90 = vld [vmem:[#allocation2 + $0x38] sm:$0xff]
    %v91 = vadd.f32 %v83, %v67
    %v92 = vadd.f32 %v84, %v68
    %v93 = vadd.f32 %v85, %v69
    %v94 = vadd.f32 %v86, %v70
    %v95 = vadd.f32 %v87, %v71
    %v96 = vadd.f32 %v88, %v72
    %v97 = vadd.f32 %v89, %v73
    %v98 = vadd.f32 %v90, %v74
    %99 = vst [vmem:[#allocation2] sm:$0xff] %v91
    %100 = vst [vmem:[#allocation2 + $0x8] sm:$0xff] %v92
    %101 = vst [vmem:[#allocation2 + $0x10] sm:$0xff] %v93
    %102 = vst [vmem:[#allocation2 + $0x18] sm:$0xff] %v94
    %103 = vst [vmem:[#allocation2 + $0x20] sm:$0xff] %v95
    %104 = vst [vmem:[#allocation2 + $0x28] sm:$0xff] %v96
    %105 = vst [vmem:[#allocation2 + $0x30] sm:$0xff] %v97
    %106 = vst [vmem:[#allocation2 + $0x38] sm:$0xff] %v98
    %v107 = vld [vmem:[#allocation3] sm:$0xff]
    %v108 = vld [vmem:[#allocation3 + $0x8] sm:$0xff]
    %v109 = vld [vmem:[#allocation3 + $0x10] sm:$0xff]
    %v110 = vld [vmem:[#allocation3 + $0x18] sm:$0xff]
    %v111 = vld [vmem:[#allocation3 + $0x20] sm:$0xff]
    %v112 = vld [vmem:[#allocation3 + $0x28] sm:$0xff]
    %v113 = vld [vmem:[#allocation3 + $0x30] sm:$0xff]
    %v114 = vld [vmem:[#allocation3 + $0x38] sm:$0xff]
    %v115 = vmax.f32 %v107, %v75
    %v116 = vmax.f32 %v108, %v76
    %v117 = vmax.f32 %v109, %v77
    %v118 = vmax.f32 %v110, %v78
    %v119 = vmax.f32 %v111, %v79
    %v120 = vmax.f32 %v112, %v80
    %v121 = vmax.f32 %v113, %v81
    %v122 = vmax.f32 %v114, %v82
    %123 = vst [vmem:[#allocation3] sm:$0xff] %v115
    %124 = vst [vmem:[#allocation3 + $0x8] sm:$0xff] %v116
    %125 = vst [vmem:[#allocation3 + $0x10] sm:$0xff] %v117
    %126 = vst [vmem:[#allocation3 + $0x18] sm:$0xff] %v118
    %127 = vst [vmem:[#allocation3 + $0x20] sm:$0xff] %v119
    %128 = vst [vmem:[#allocation3 + $0x28] sm:$0xff] %v120
    %129 = vst [vmem:[#allocation3 + $0x30] sm:$0xff] %v121
    %130 = vst [vmem:[#allocation3 + $0x38] sm:$0xff] %v122
    // Predicated region
    $region22: #{tpu_custom_call.1} parent=1 // pred_check
      %p131 = pneg %p31
    $region23: #{tpu_custom_call.1} parent=1 // pred_check_branch
      %133 = sbr.rel (%p131) target = $region25
    $region24: #{tpu_custom_call.1} parent=1 // pred_region
      %v134 = vld [vmem:[#allocation2] sm:$0xff]
      %v135 = vld [vmem:[#allocation2 + $0x8] sm:$0xff]
      %v136 = vld [vmem:[#allocation2 + $0x10] sm:$0xff]
      %v137 = vld [vmem:[#allocation2 + $0x18] sm:$0xff]
      %v138 = vld [vmem:[#allocation2 + $0x20] sm:$0xff]
      %v139 = vld [vmem:[#allocation2 + $0x28] sm:$0xff]
      %v140 = vld [vmem:[#allocation2 + $0x30] sm:$0xff]
      %v141 = vld [vmem:[#allocation2 + $0x38] sm:$0xff]
      %142 = vadd.xlane.f32.xlu0 %v134
      %v143 = vpop.xlane.xlu0 %142
      %144 = vadd.xlane.f32.xlu0 %v135
      %v145 = vpop.xlane.xlu0 %144
      %146 = vadd.xlane.f32.xlu0 %v136
      %v147 = vpop.xlane.xlu0 %146
      %148 = vadd.xlane.f32.xlu0 %v137
      %v149 = vpop.xlane.xlu0 %148
      %150 = vadd.xlane.f32.xlu0 %v138
      %v151 = vpop.xlane.xlu0 %150
      %152 = vadd.xlane.f32.xlu0 %v139
      %v153 = vpop.xlane.xlu0 %152
      %154 = vadd.xlane.f32.xlu0 %v140
      %v155 = vpop.xlane.xlu0 %154
      %156 = vadd.xlane.f32.xlu0 %v141
      %v157 = vpop.xlane.xlu0 %156
      %v158 = vmul.f32 %v143, 0.00390625
      %v159 = vmul.f32 %v145, 0.00390625
      %v160 = vmul.f32 %v147, 0.00390625
      %v161 = vmul.f32 %v149, 0.00390625
      %v162 = vmul.f32 %v151, 0.00390625
      %v163 = vmul.f32 %v153, 0.00390625
      %v164 = vmul.f32 %v155, 0.00390625
      %v165 = vmul.f32 %v157, 0.00390625
      %v166 = vld [vmem:[#allocation3] sm:$0xff]
      %v167 = vld [vmem:[#allocation3 + $0x8] sm:$0xff]
      %v168 = vld [vmem:[#allocation3 + $0x10] sm:$0xff]
      %v169 = vld [vmem:[#allocation3 + $0x18] sm:$0xff]
      %v170 = vld [vmem:[#allocation3 + $0x20] sm:$0xff]
      %v171 = vld [vmem:[#allocation3 + $0x28] sm:$0xff]
      %v172 = vld [vmem:[#allocation3 + $0x30] sm:$0xff]
      %v173 = vld [vmem:[#allocation3 + $0x38] sm:$0xff]
      %174 = vmax.xlane.f32.xlu0 %v166
      %v175 = vpop.xlane.xlu0 %174
      %176 = vmax.xlane.f32.xlu0 %v167
      %v177 = vpop.xlane.xlu0 %176
      %178 = vmax.xlane.f32.xlu0 %v168
      %v179 = vpop.xlane.xlu0 %178
      %180 = vmax.xlane.f32.xlu0 %v169
      %v181 = vpop.xlane.xlu0 %180
      %182 = vmax.xlane.f32.xlu0 %v170
      %v183 = vpop.xlane.xlu0 %182
      %184 = vmax.xlane.f32.xlu0 %v171
      %v185 = vpop.xlane.xlu0 %184
      %186 = vmax.xlane.f32.xlu0 %v172
      %v187 = vpop.xlane.xlu0 %186
      %188 = vmax.xlane.f32.xlu0 %v173
      %v189 = vpop.xlane.xlu0 %188
      %v198 = vlaneseq
      %v199 = vand.u32 %v198, 127
      %v200 = vperm.slane %v158, %v199
      %v201 = vadd.s32 %v199, 4294967288
      %v202 = vperm.slane %v159, %v201
      %vm203 = vcmask 130112
      %v204 = vsel %vm203, %v202, %v200
      %v205 = vadd.s32 %v199, 4294967280
      %v206 = vperm.slane %v160, %v205
      %vm207 = vcmask 195712
      %v208 = vsel %vm207, %v206, %v204
      %v209 = vadd.s32 %v199, 4294967272
      %v210 = vperm.slane %v161, %v209
      %vm211 = vcmask 261312
      %v212 = vsel %vm211, %v210, %v208
      %v213 = vperm.slane %v162, %v199
      %v214 = vperm.slane %v163, %v201
      %v215 = vsel %vm203, %v214, %v213
      %v216 = vperm.slane %v164, %v205
      %v217 = vsel %vm207, %v216, %v215
      %v218 = vperm.slane %v165, %v209
      %v219 = vsel %vm211, %v218, %v217
      %vm220 = vcmask 1041409
      %v221 = vsel %vm220, %v219, %v212
      %v231 = vperm.slane %v175, %v199
      %v232 = vperm.slane %v177, %v201
      %v233 = vsel %vm203, %v232, %v231
      %v234 = vperm.slane %v179, %v205
      %v235 = vsel %vm207, %v234, %v233
      %v236 = vperm.slane %v181, %v209
      %v237 = vsel %vm211, %v236, %v235
      %v238 = vperm.slane %v183, %v199
      %v239 = vperm.slane %v185, %v201
      %v240 = vsel %vm203, %v239, %v238
      %v241 = vperm.slane %v187, %v205
      %v242 = vsel %vm207, %v241, %v240
      %v243 = vperm.slane %v189, %v209
      %v244 = vsel %vm211, %v243, %v242
      %vm245 = vcmask 1043459
      %v246 = vsel %vm245, %v244, %v237
      %vm248 = vcmask 1041408
      %v249 = vsel %vm248, %v221, %v246
      %v250 = vld [vmem:[%s1] sm:$0xff]
      %v251 = vld [vmem:[%s1 + $0x8] sm:$0xff]
      %v252 = vld [vmem:[%s1 + $0x10] sm:$0xff]
      %v253 = vld [vmem:[%s1 + $0x18] sm:$0xff]
      %vm254 = vcmask 261120
      %v256 = vsel %vm254, %v249, 0
      %258 = vmatpush.msra.mxu0 0.0
      %259 = vmatpush.msra.mxu0 0.0
      %260 = vmatpush.msra.mxu0 0.0
      %261 = vmatpush.msra.mxu0 0.0
      %262 = vmatpush.msra.mxu0 0.0
      %263 = vmatpush.msra.mxu0 0.0
      %264 = vmatpush.msra.mxu0 0.0
      %265 = vmatpush.msra.mxu0 0.0
      %266 = vmatpush.msra.mxu0 0.0
      %267 = vmatpush.msra.mxu0 0.0
      %268 = vmatpush.msra.mxu0 0.0
      %269 = vmatpush.msra.mxu0 0.0
      %270 = vmatpush.msra.mxu0 %v253
      %271 = vmatpush.msra.mxu0 %v252
      %272 = vmatpush.msra.mxu0 %v251
      %273 = vmatpush.msra.mxu0 %v250
      %274 = vmatmul.f32.gmra.mxu0 %v256
      %v275 = vpop.f32.mrf.mxu0
      %v276 = vadd.f32 0.0, %v275
      %277 = vdwg.mxu0
      %v278 = vmax.f32 %v276, 0.0
      %v279 = vld [vmem:[%s2] sm:$0x3]
      %vm280 = vcmask 15360
      %v282 = vsel %vm280, %v278, 0
      %v285 = vsel %vm248, %v279, 0
      %287 = vmatpush.msra.mxu0 0.0
      %288 = vmatpush.msra.mxu0 0.0
      %289 = vmatpush.msra.mxu0 0.0
      %290 = vmatpush.msra.mxu0 0.0
      %291 = vmatpush.msra.mxu0 0.0
      %292 = vmatpush.msra.mxu0 0.0
      %293 = vmatpush.msra.mxu0 0.0
      %294 = vmatpush.msra.mxu0 0.0
      %295 = vmatpush.msra.mxu0 0.0
      %296 = vmatpush.msra.mxu0 0.0
      %297 = vmatpush.msra.mxu0 0.0
      %298 = vmatpush.msra.mxu0 0.0
      %299 = vmatpush.msra.mxu0 0.0
      %300 = vmatpush.msra.mxu0 0.0
      %301 = vmatpush.msra.mxu0 0.0
      %302 = vmatpush.msra.mxu0 %v285
      %303 = vmatmul.f32.gmra.mxu0 %v282
      %v304 = vpop.f32.mrf.mxu0
      %v305 = vadd.f32 0.0, %v304
      %306 = vdwg.mxu0
      %v308 = vrot.slane %v305, 2
      %v310 = vadd.f32 %v305, %v308
      %v311 = vxor.u32 %v310, 2147483648
      %v312 = vmul.f32 %v311, 1.442695
      %v313 = vpow.pop %v312
      %v314 = vadd.f32 %v313, 1.0
      %v315 = vrcp.pop %v314
      %v316 = vmul.f32 %v314, %v315
      %v317 = vsub.f32 1.0, %v316
      %v318 = vmul.f32 %v315, %v317
      %v319 = vadd.f32 %v315, %v318
      %vm320 = vweird.f32 %v314
      %vm321 = vweird.f32 %v315
      %vm322 = vmor %vm320, %vm321
      %v323 = vsel %vm322, %v315, %v319
      %v324 = vand.u32 2147483647, %v314
      %vm325 = vcmp.eq.f32.partialorder %v324, 8.507059e+37
      %v326 = vand.u32 %v314, 2147483648
      %v327 = vor.u32 1.1754944e-38, %v326
      %v328 = vsel %vm325, %v327, %v323
      %v329 = vmul.f32 1.0, %v328
      %v331 = vrot.slane %v329, 1
      %vm333 = vcmask 253952
      %334 = vst.msk [vmem:[#allocation7] sm:$0x1] %vm333, %v329
      %335 = vst.msk [vmem:[#allocation7 + $0x1] sm:$0x1] %vm333, %v331
    $region25: #{tpu_custom_call.1} parent=1 // pred_fallthru
      _
    // Predicated region
    $region26: #{tpu_custom_call.1} parent=1 // pred_check
      _
    $region27: #{tpu_custom_call.1} parent=1 // pred_check_branch
      %337 = sbr.rel (0) target = $region29
    $region28: #{tpu_custom_call.1} parent=1 // pred_region
      %339 = vsyncadd [#allocation6], 0
      %s340 = sshll.u32 [#allocation7], 4
      %s341 = int_to_ptr.vmem [resolvable:$true] %s340
      %s342 = sshll.u32 %s3, 4
      %s343 = int_to_ptr.hbm [resolvable:$true] %s342
      %348 = dma.vmem_to_hbm [thread:$0]  %s341, 32, %s343, [#allocation6], 16, 16, 1
    $region29: #{tpu_custom_call.1} parent=1 // pred_fallthru
      _
    // Predicated region
    $region30: #{tpu_custom_call.1} parent=1 // pred_check
      _
    $region31: #{tpu_custom_call.1} parent=1 // pred_check_branch
      %350 = sbr.rel (0) target = $region33
    $region32: #{tpu_custom_call.1} parent=1 // pred_region
      %352 = dma.done [#allocation6], 32
    $region33: #{tpu_custom_call.1} parent=1 // pred_fallthru
      _
    %353 = vsyncpa [#allocation5], 1
    %354 = vsyncpa [#allocation6], 1

</llo_original>
